<compile_context>
chip_gen: v7x
topology: tpu7x:2x2x1
jax: 0.10.0
libtpu: 0.0.40
codegen_flags: <defaults>
</compile_context>

<pallas_src>
import functools

import jax
import jax.numpy as jnp
from jax.experimental import pallas as pl
from jax.experimental.pallas import tpu as pltpu


def _round_up(x, m):
    return ((x + m - 1) // m) * m


def _padded_bytes(rows, cols, dtype):
    """VMEM footprint of one (rows, cols) block after (8, 128) tile padding."""
    r = _round_up(max(rows, 1), 8)
    c = _round_up(max(cols, 1), 128)
    return r * c * jnp.dtype(dtype).itemsize


def _vmem_budget_bytes():
    """Generation-aware usable VMEM (leave ~25% for Mosaic internal scratch).

    v5e/v6e (128 MiB) -> ~96 MiB; v7x (64 MiB per core) -> ~48 MiB.
    """
    cap = 64 * 1024 * 1024  # conservative fallback
    try:
        cap = int(getattr(pltpu.get_tpu_info(), "vmem_capacity_bytes", cap))
    except Exception:
        pass
    return (cap * 3) // 4


# ---------------------------------------------------------------------------
# Kernels
# ---------------------------------------------------------------------------
def _residual_kernel_resident_w(x_ref, w_ref, b_ref, o_ref, *, compute_dtype):
    # x_ref: (TM, H)   w_ref: (H, H) resident   b_ref: (1, H) resident
    x = x_ref[...]
    acc = jnp.dot(
        x.astype(compute_dtype), w_ref[...], preferred_element_type=jnp.float32
    )  # MXU, f32 accumulate
    out = acc + b_ref[...].astype(jnp.float32) + x.astype(jnp.float32)
    o_ref[...] = out.astype(o_ref.dtype)


def _residual_kernel_tiled_n(x_ref, w_ref, b_ref, o_ref, *, tn, compute_dtype):
    # Grid = (N outer, M inner): w_ref (H, TN) changes only when j changes, so
    # it is DMA'd once per column slab while disjoint x row blocks stream
    # along the inner (megacore-sharded) M axis.
    j = pl.program_id(0)
    x = x_ref[...]
    acc = jnp.dot(
        x.astype(compute_dtype), w_ref[...], preferred_element_type=jnp.float32
    )
    col0 = pl.multiple_of(j * tn, tn)            # 128-aligned dynamic start
    x_res = x_ref[:, pl.ds(col0, tn)]            # residual slice of this N tile
    b_slab = b_ref[:, pl.ds(col0, tn)]           # bias slice (bias resident)
    out = acc + b_slab.astype(jnp.float32) + x_res.astype(jnp.float32)
    o_ref[...] = out.astype(o_ref.dtype)


# ---------------------------------------------------------------------------
# Wrapper
# ---------------------------------------------------------------------------
def residual_linear(x, w, b, *, matmul_dtype=None, tm_target=512, n_tile=None,
                    force_n_tiling=False):
    """out = x @ w + b + x  (Residual(Linear)) with x: (B,S,H), w: (H,H), b: (H,)."""
    B, S, H = x.shape
    assert w.shape == (H, H) and b.shape == (H,)
    out_dtype = x.dtype
    M = B * S

    # bf16 MXU matmul by default for f32 inputs; accumulation is always f32 and
    # the residual/bias adds happen in f32, so only the matmul loses precision.
    if matmul_dtype is not None:
        compute_dtype = jnp.dtype(matmul_dtype)
    elif x.dtype == jnp.float32:
        compute_dtype = jnp.dtype(jnp.bfloat16)
    else:
        compute_dtype = jnp.dtype(x.dtype)
    # Pre-cast W at parameter-init time when possible (see demo); casting here
    # costs one extra HBM pass over W per call.
    w_c = w if w.dtype == compute_dtype else w.astype(compute_dtype)

    x2d = x.reshape(M, H)
    b2d = b.reshape(1, H)

    budget = _vmem_budget_bytes()
    x_it = jnp.dtype(x.dtype).itemsize
    o_it = jnp.dtype(out_dtype).itemsize
    w_it = jnp.dtype(compute_dtype).itemsize

    def _pick_tm(resident_bytes, k_cols, out_cols):
        """Largest TM (multiple of 8, or == M) whose double-buffered x/out
        blocks fit next to the resident data within the VMEM budget."""
        cands = []
        if M <= tm_target:
            cands.append(M)                       # full-M block (always legal)
        t = min(_round_up(tm_target, 8), _round_up(M, 8))
        while t >= 8:
            cands.append(t)
            t = (t // 2 // 8) * 8                 # halve, keep multiple of 8
        for tm in cands:
            step = 2 * (_padded_bytes(tm, k_cols, x.dtype)
                        + _padded_bytes(tm, out_cols, out_dtype))
            if resident_bytes + step <= budget:
                return tm
        return None

    # Resident data for the full-W path (conservatively count double buffers).
    w_res_bytes = 2 * _padded_bytes(H, H, compute_dtype)
    b_res_bytes = 2 * _padded_bytes(1, H, b2d.dtype)
    tm_resident = None if force_n_tiling else _pick_tm(w_res_bytes + b_res_bytes, H, H)

    if tm_resident is not None:
        # ---- Path A: whole W resident in VMEM, 1-D grid over M -------------
        TM = tm_resident
        grid = (pl.cdiv(M, TM),)
        kernel = functools.partial(
            _residual_kernel_resident_w, compute_dtype=compute_dtype
        )
        in_specs = [
            pl.BlockSpec((TM, H), lambda i: (i, 0)),   # x rows, streamed
            pl.BlockSpec((H, H), lambda i: (0, 0)),    # W: constant index -> DMA'd once
            pl.BlockSpec((1, H), lambda i: (0, 0)),    # bias: DMA'd once
        ]
        out_specs = pl.BlockSpec((TM, H), lambda i: (i, 0))
        dim_sem = ("parallel",)                        # shard M across TCs (v7x)
        x_bytes = M * H * x_it
    else:
        # ---- Path B: W column slabs, grid = (N outer, M inner) -------------
        assert H % 128 == 0, "N-tiled path needs a lane-aligned (mult. of 128) H"
        if n_tile is not None:
            assert H % n_tile == 0 and n_tile % 128 == 0
            TN = n_tile
        else:
            TN = next(t for t in (512, 256, 128) if H % t == 0)
        resident = 2 * _padded_bytes(H, TN, compute_dtype) + b_res_bytes
        TM = _pick_tm(resident, H, TN)
        assert TM is not None, (
            "Working set exceeds VMEM even at TM=8; needs the K-tiling path "
            "(TODO) for this hidden size."
        )
        grid = (H // TN, pl.cdiv(M, TM))
        kernel = functools.partial(
            _residual_kernel_tiled_n, tn=TN, compute_dtype=compute_dtype
        )
        in_specs = [
            pl.BlockSpec((TM, H), lambda j, i: (i, 0)),   # x rows (full K)
            pl.BlockSpec((H, TN), lambda j, i: (0, j)),   # W slab: j-only -> once per slab
            pl.BlockSpec((1, H), lambda j, i: (0, 0)),    # bias: DMA'd once
        ]
        out_specs = pl.BlockSpec((TM, TN), lambda j, i: (i, j))
        dim_sem = ("arbitrary", "parallel")   # shard M (disjoint x), share W slab
        x_bytes = (H // TN) * M * H * x_it

    cost = pl.CostEstimate(
        flops=2 * M * H * H,
        transcendentals=0,
        bytes_accessed=int(
            x_bytes + H * H * w_it + H * b2d.dtype.itemsize + M * H * o_it
        ),
    )

    out2d = pl.pallas_call(
        kernel,
        out_shape=jax.ShapeDtypeStruct((M, H), out_dtype),
        grid_spec=pltpu.PrefetchScalarGridSpec(
            num_scalar_prefetch=0,
            grid=grid,
            in_specs=in_specs,
            out_specs=out_specs,
        ),
        compiler_params=pltpu.CompilerParams(
            dimension_semantics=dim_sem,
            vmem_limit_bytes=budget,
        ),
        cost_estimate=cost,
    )(x2d, w_c, b2d)

    return out2d.reshape(B, S, H)


if __name__ == "__main__":
    key = jax.random.PRNGKey(0)
    kx, kw, kb = jax.random.split(key, 3)

    # Small shapes consistent with Residual's forward (fn preserves shape);
    # H is a multiple of 128 so output stores are lane-dense.
    B, S, H = 2, 8, 128
    x = jax.random.normal(kx, (B, S, H), dtype=jnp.float32)
    w = jax.random.normal(kw, (H, H), dtype=jnp.float32) * (1.0 / jnp.sqrt(H))
    b = jax.random.normal(kb, (H,), dtype=jnp.float32) * 0.01

    # Reference: Residual semantics = fn(x) + x (full-precision einsum).
    ref = (
        jnp.einsum("bsh,hk->bsk", x, w, precision=jax.lax.Precision.HIGHEST)
        + b
        + x
    )

    # Default path: bf16 MXU matmul (f32 accumulate), W resident in VMEM.
    # W is pre-cast once, parameter-init style, so no per-call cast pass.
    w_bf16 = w.astype(jnp.bfloat16)
    out = jax.block_until_ready(residual_linear(x, w_bf16, b))
    assert out.shape == x.shape and out.dtype == x.dtype
    assert jnp.allclose(out, ref, atol=1e-1, rtol=1e-1)

    # Exact f32 matmul path (explicit opt-in).
    out_f32 = jax.block_until_ready(residual_linear(x, w, b, matmul_dtype=jnp.float32))
    assert jnp.allclose(out_f32, ref, atol=1e-3, rtol=1e-3)

    # Ragged M (3*5 = 15 rows, not a multiple of 8): handled as a full-M block,
    # no wrapper-side padding or slicing round-trips.
    B2, S2 = 3, 5
    x2 = jax.random.normal(jax.random.PRNGKey(2), (B2, S2, H), dtype=jnp.float32)
    ref2 = (
        jnp.einsum("bsh,hk->bsk", x2, w, precision=jax.lax.Precision.HIGHEST)
        + b
        + x2
    )
    out2 = jax.block_until_ready(residual_linear(x2, w, b, matmul_dtype=jnp.float32))
    assert jnp.allclose(out2, ref2, atol=1e-3, rtol=1e-3)

    # Large-H fallback path (N-outer / M-inner W slabs), exercised at a small
    # shape by forcing tiling.
    H3 = 256
    kx3, kw3, kb3 = jax.random.split(jax.random.PRNGKey(1), 3)
    x3 = jax.random.normal(kx3, (B, S, H3), dtype=jnp.float32)
    w3 = jax.random.normal(kw3, (H3, H3), dtype=jnp.float32) * (1.0 / jnp.sqrt(H3))
    b3 = jax.random.normal(kb3, (H3,), dtype=jnp.float32) * 0.01
    ref3 = (
        jnp.einsum("bsh,hk->bsk", x3, w3, precision=jax.lax.Precision.HIGHEST)
        + b3
        + x3
    )
    out3 = jax.block_until_ready(
        residual_linear(
            x3, w3, b3, matmul_dtype=jnp.float32, force_n_tiling=True, n_tile=128
        )
    )
    assert jnp.allclose(out3, ref3, atol=1e-3, rtol=1e-3)

    print("KERNEL_OK")
</pallas_src>

<mosaic_0001>
module attributes {stable_mosaic.version = 11 : i64} {
  func.func @_residual_kernel_resident_w(%arg0: i32, %arg1: memref<16x128xf32, #tpu.memory_space<vmem>>, %arg2: memref<128x128xbf16, #tpu.memory_space<vmem>>, %arg3: memref<1x128xf32, #tpu.memory_space<vmem>>, %arg4: memref<16x128xf32, #tpu.memory_space<vmem>>) attributes {dimension_semantics = [#tpu.dimension_semantics<parallel>], iteration_bounds = array<i64: 1>, scalar_prefetch = 0 : i64, scratch_operands = 0 : i64, tpu.core_type = #tpu.core_type<tc>, window_params = [{transform_indices = @transform_0, window_bounds = array<i64: 16, 128>}, {pipeline_mode = #tpu.pipeline_mode<synchronous>, transform_indices = @transform_1, window_bounds = array<i64: 128, 128>}, {pipeline_mode = #tpu.pipeline_mode<synchronous>, transform_indices = @transform_2, window_bounds = array<i64: 1, 128>}, {transform_indices = @transform_3, window_bounds = array<i64: 16, 128>}]} {
    %c0 = arith.constant 0 : index
    %c0_0 = arith.constant 0 : index
    %0 = vector.load %arg1[%c0, %c0_0] : memref<16x128xf32, #tpu.memory_space<vmem>>, vector<16x128xf32>
    %1 = arith.truncf %0 : vector<16x128xf32> to vector<16x128xbf16>
    %c0_1 = arith.constant 0 : index
    %c0_2 = arith.constant 0 : index
    %2 = vector.load %arg2[%c0_1, %c0_2] : memref<128x128xbf16, #tpu.memory_space<vmem>>, vector<128x128xbf16>
    %cst = arith.constant dense<0.000000e+00> : vector<16x128xf32>
    %3 = tpu.matmul %1, %2, %cst {dimension_numbers = #tpu.dot_dimension_numbers<[1], [0], [0], [1], [0, 0, 1, 1], [], []>} : vector<16x128xbf16>, vector<128x128xbf16>, vector<16x128xf32> -> vector<16x128xf32>
    %c0_3 = arith.constant 0 : index
    %c0_4 = arith.constant 0 : index
    %4 = vector.load %arg3[%c0_3, %c0_4] : memref<1x128xf32, #tpu.memory_space<vmem>>, vector<1x128xf32>
    %5 = vector.broadcast %4 : vector<1x128xf32> to vector<16x128xf32>
    %6 = arith.addf %3, %5 : vector<16x128xf32>
    %7 = arith.addf %6, %0 : vector<16x128xf32>
    %c0_5 = arith.constant 0 : index
    %c0_6 = arith.constant 0 : index
    %8 = vector.load %arg4[%c0_5, %c0_6] : memref<16x128xf32, #tpu.memory_space<vmem>>, vector<16x128xf32>
    tpu.vector_store %arg4[%c0_5, %c0_6], %7 {strides = array<i32>} : memref<16x128xf32, #tpu.memory_space<vmem>>, vector<16x128xf32>,
    return
  }
  func.func @transform_0(%arg0: i32) -> (i32, i32) {
    %c0_i32 = arith.constant 0 : i32
    %c0_i32_0 = arith.constant 0 : i32
    return %arg0, %c0_i32 : i32, i32
  }
  func.func @transform_1(%arg0: i32) -> (i32, i32) {
    %c0_i32 = arith.constant 0 : i32
    %c0_i32_0 = arith.constant 0 : i32
    %c0_i32_1 = arith.constant 0 : i32
    return %c0_i32, %c0_i32_0 : i32, i32
  }
  func.func @transform_2(%arg0: i32) -> (i32, i32) {
    %c0_i32 = arith.constant 0 : i32
    %c0_i32_0 = arith.constant 0 : i32
    %c0_i32_1 = arith.constant 0 : i32
    return %c0_i32, %c0_i32_0 : i32, i32
  }
  func.func @transform_3(%arg0: i32) -> (i32, i32) {
    %c0_i32 = arith.constant 0 : i32
    %c0_i32_0 = arith.constant 0 : i32
    return %arg0, %c0_i32 : i32, i32
  }
}

</mosaic_0001>

<llo_original>
// kernel: tpu_custom_call.1
$region0: #{tpu_custom_call.1}
  #allocation0 [shape = 'u32[]', space=smem, size = 0x4, offset = 0x4, fixed_abs, tag = 'smem constant byte address 0x4 - core index']
  #allocation1 [shape = 'u32[144,128]{1,0:T(1,128)}', space=vmem, size = 0x12000, scoped, tag = 'internal scratch']
  %s0 = inlined_call_operand.hbm [shape: f32[16,128], index: 0, kind: input, shape index: {}]
  %s1 = inlined_call_operand.hbm [shape: bf16[128,128], index: 1, kind: input, shape index: {}]
  %s2 = inlined_call_operand.vmem [shape: f32[1,128], index: 2, kind: input, shape index: {}]
  %s3 = inlined_call_operand.hbm [shape: f32[16,128], index: 3, kind: output, shape index: {}]
  %s4 = sld [smem:[#allocation0]]
  $region30: #{tpu_custom_call.1} parent=0
    _
  %s6 = ssub.s32 1, %s4
  %s7 = scalar_select 0, %s6, %s4
  $region1: #{tpu_custom_call.1} parent=0
    #allocation2 [shape = 'u8[8192]{0}', space=vmem, size = 0x2000, scoped, tag = 'input window, operand 0, single buffered']
    #allocation3 [shape = 's32[1]{0}', space=sflag, size = 0x4, scoped, tag = 'scoped memory for tpu_custom_call.1']
    #allocation4 [shape = 's32[1]{0}', space=sflag, size = 0x4, scoped, tag = 'scoped memory for tpu_custom_call.1']
    #allocation5 [shape = 'u8[32768]{0}', space=vmem, size = 0x8000, scoped, tag = 'input window, operand 1, single buffered']
    #allocation6 [shape = 's32[1]{0}', space=sflag, size = 0x4, scoped, tag = 'scoped memory for tpu_custom_call.1']
    #allocation7 [shape = 'u8[8192]{0}', space=vmem, size = 0x2000, scoped, tag = 'output window, operand 0, single buffered']
    %8 = vsyncpa [#allocation3], 0
    %9 = vsyncpa [#allocation6], 0
    %10 = vsyncpa [#allocation4], 0
    // Predicated region
    $region2: #{tpu_custom_call.1} parent=1 // pred_check
      _
    $region3: #{tpu_custom_call.1} parent=1 // pred_check_branch
      %12 = sbr.rel (0) target = $region5
    $region4: #{tpu_custom_call.1} parent=1 // pred_region
      %s14 = ssub.s32 256, 256
      %15 = vsyncadd [#allocation3], %s14
      %s16 = sshll.u32 [#allocation2], 4
      %s17 = int_to_ptr.vmem [resolvable:$true] %s16
      %22 = dma.hbm_to_vmem [thread:$0]  %s0, 256, %s17, [#allocation3], 128, 128, 8
    $region5: #{tpu_custom_call.1} parent=1 // pred_fallthru
      _
    // Predicated region
    $region6: #{tpu_custom_call.1} parent=1 // pred_check
      _
    $region7: #{tpu_custom_call.1} parent=1 // pred_check_branch
      %24 = sbr.rel (0) target = $region9
    $region8: #{tpu_custom_call.1} parent=1 // pred_region
      %s26 = ssub.s32 1024, 1024
      %27 = vsyncadd [#allocation6], %s26
      %s28 = sshll.u32 [#allocation5], 4
      %s29 = int_to_ptr.vmem [resolvable:$true] %s28
      %34 = dma.hbm_to_vmem [thread:$0]  %s1, 1024, %s29, [#allocation6], 64, 64, 4
    $region9: #{tpu_custom_call.1} parent=1 // pred_fallthru
      _
    // Predicated region
    $region10: #{tpu_custom_call.1} parent=1 // pred_check
      _
    $region11: #{tpu_custom_call.1} parent=1 // pred_check_branch
      %36 = sbr.rel (0) target = $region13
    $region12: #{tpu_custom_call.1} parent=1 // pred_region
      _
    $region13: #{tpu_custom_call.1} parent=1 // pred_fallthru
      _
    // Predicated region
    $region14: #{tpu_custom_call.1} parent=1 // pred_check
      _
    $region15: #{tpu_custom_call.1} parent=1 // pred_check_branch
      %38 = sbr.rel (0) target = $region17
    $region16: #{tpu_custom_call.1} parent=1 // pred_region
      %39 = dma.done [#allocation3], 256
    $region17: #{tpu_custom_call.1} parent=1 // pred_fallthru
      _
    // Predicated region
    $region18: #{tpu_custom_call.1} parent=1 // pred_check
      _
    $region19: #{tpu_custom_call.1} parent=1 // pred_check_branch
      %41 = sbr.rel (0) target = $region21
    $region20: #{tpu_custom_call.1} parent=1 // pred_region
      %42 = dma.done [#allocation6], 1024
    $region21: #{tpu_custom_call.1} parent=1 // pred_fallthru
      _
    %v44 = vld [vmem:[#allocation2] sm:$0xff]
    %v45 = vld [vmem:[#allocation2 + $0x8] sm:$0xff]
    %v46 = vpack.c.bf16 %v45, %v44
    %v47 = vld [vmem:[#allocation5] sm:$0xf]
    %v48 = vld [vmem:[#allocation5 + $0x4] sm:$0xf]
    %v49 = vld [vmem:[#allocation5 + $0x8] sm:$0xf]
    %v50 = vld [vmem:[#allocation5 + $0xc] sm:$0xf]
    %v51 = vld [vmem:[#allocation5 + $0x10] sm:$0xf]
    %v52 = vld [vmem:[#allocation5 + $0x14] sm:$0xf]
    %v53 = vld [vmem:[#allocation5 + $0x18] sm:$0xf]
    %v54 = vld [vmem:[#allocation5 + $0x1c] sm:$0xf]
    %v55 = vld [vmem:[#allocation5 + $0x20] sm:$0xf]
    %v56 = vld [vmem:[#allocation5 + $0x24] sm:$0xf]
    %v57 = vld [vmem:[#allocation5 + $0x28] sm:$0xf]
    %v58 = vld [vmem:[#allocation5 + $0x2c] sm:$0xf]
    %v59 = vld [vmem:[#allocation5 + $0x30] sm:$0xf]
    %v60 = vld [vmem:[#allocation5 + $0x34] sm:$0xf]
    %v61 = vld [vmem:[#allocation5 + $0x38] sm:$0xf]
    %v62 = vld [vmem:[#allocation5 + $0x3c] sm:$0xf]
    %v63 = vld [vmem:[%s2] sm:$0x1]
    %v65 = vlaneseq
    %v66 = vshrl.u32 %v65, 7
    %v67 = vsub.s32 0, %v66
    %v68 = vrot.slane %v63, %v67
    %v86 = vunpack.c.l.b16 %v47
    %v87 = vunpack.c.l.b16 %v48
    %v88 = vunpack.c.l.b16 %v49
    %v89 = vunpack.c.l.b16 %v50
    %v90 = vunpack.c.l.b16 %v51
    %v91 = vunpack.c.l.b16 %v52
    %v92 = vunpack.c.l.b16 %v53
    %v93 = vunpack.c.l.b16 %v54
    %v94 = vunpack.c.l.b16 %v55
    %v95 = vunpack.c.l.b16 %v56
    %v96 = vunpack.c.l.b16 %v57
    %v97 = vunpack.c.l.b16 %v58
    %v98 = vunpack.c.l.b16 %v59
    %v99 = vunpack.c.l.b16 %v60
    %v100 = vunpack.c.l.b16 %v61
    %v101 = vunpack.c.l.b16 %v62
    %v102 = vpack.c.b16 %v87, %v86
    %v103 = vpack.c.b16 %v89, %v88
    %v104 = vpack.c.b16 %v91, %v90
    %v105 = vpack.c.b16 %v93, %v92
    %v106 = vpack.c.b16 %v95, %v94
    %v107 = vpack.c.b16 %v97, %v96
    %v108 = vpack.c.b16 %v99, %v98
    %v109 = vpack.c.b16 %v101, %v100
    %118 = vmatprep.subr.bf16.mxu0 0
    %119 = vmatpush1.bf16.msra.mxu0 %v102
    %120 = vmatprep.subr.bf16.mxu0 0
    %121 = vmatpush1.bf16.msra.mxu0 %v103
    %122 = vmatprep.subr.bf16.mxu0 0
    %123 = vmatpush1.bf16.msra.mxu0 %v104
    %124 = vmatprep.subr.bf16.mxu0 0
    %125 = vmatpush1.bf16.msra.mxu0 %v105
    %126 = vmatprep.subr.bf16.mxu0 0
    %127 = vmatpush1.bf16.msra.mxu0 %v106
    %128 = vmatprep.subr.bf16.mxu0 0
    %129 = vmatpush1.bf16.msra.mxu0 %v107
    %130 = vmatprep.subr.bf16.mxu0 0
    %131 = vmatpush1.bf16.msra.mxu0 %v108
    %132 = vmatprep.subr.bf16.mxu0 0
    %133 = vmatpush1.bf16.msra.mxu0 %v109
    %134 = vmatprep.subr.bf16.mxu0 0
    %135 = vmatpush1.bf16.msra.mxu0 0
    %136 = vmatprep.subr.bf16.mxu0 0
    %137 = vmatpush1.bf16.msra.mxu0 0
    %138 = vmatprep.subr.bf16.mxu0 0
    %139 = vmatpush1.bf16.msra.mxu0 0
    %140 = vmatprep.subr.bf16.mxu0 0
    %141 = vmatpush1.bf16.msra.mxu0 0
    %142 = vmatprep.subr.bf16.mxu0 0
    %143 = vmatpush1.bf16.msra.mxu0 0
    %144 = vmatprep.subr.bf16.mxu0 0
    %145 = vmatpush1.bf16.msra.mxu0 0
    %146 = vmatprep.subr.bf16.mxu0 0
    %147 = vmatpush1.bf16.msra.mxu0 0
    %148 = vmatprep.subr.bf16.mxu0 0
    %149 = vmatpush1.bf16.msra.mxu0 0
    %150 = vmatprep.mubr.bf16.mxu0 0
    %151 = vmatmul.mubr.bf16.gmra.mrb[0].mxu0 %v46
    %v152 = vpop.f32.mrb[0].mxu0
    %v153 = vadd.f32 %v68, %v152
    %v154 = vpop.f32.mrb[0].mxu0
    %v155 = vpop.f32.mrb[0].mxu0
    %v156 = vadd.f32 %v68, %v155
    %v157 = vpop.f32.mrb[0].mxu0
    %158 = vdwg.mxu0
    %v159 = vadd.f32 %v153, %v44
    %v160 = vadd.f32 %v156, %v45
    %161 = vst [vmem:[#allocation7] sm:$0xff] %v159
    %162 = vst [vmem:[#allocation7 + $0x8] sm:$0xff] %v160
    // Predicated region
    $region22: #{tpu_custom_call.1} parent=1 // pred_check
      _
    $region23: #{tpu_custom_call.1} parent=1 // pred_check_branch
      %164 = sbr.rel (0) target = $region25
    $region24: #{tpu_custom_call.1} parent=1 // pred_region
      %s166 = ssub.s32 256, 256
      %167 = vsyncadd [#allocation4], %s166
      %s168 = sshll.u32 [#allocation7], 4
      %s169 = int_to_ptr.vmem [resolvable:$true] %s168
      %174 = dma.vmem_to_hbm [thread:$0]  %s169, 256, %s3, [#allocation4], 128, 128, 8
    $region25: #{tpu_custom_call.1} parent=1 // pred_fallthru
      _
    // Predicated region
    $region26: #{tpu_custom_call.1} parent=1 // pred_check
      _
    $region27: #{tpu_custom_call.1} parent=1 // pred_check_branch
      %176 = sbr.rel (0) target = $region29
    $region28: #{tpu_custom_call.1} parent=1 // pred_region
      %177 = dma.done [#allocation4], 256
    $region29: #{tpu_custom_call.1} parent=1 // pred_fallthru
      _
    %178 = vsyncpa [#allocation3], 1
    %179 = vsyncpa [#allocation6], 1
    %180 = vsyncpa [#allocation4], 1

</llo_original>
